<compile_context>
chip_gen: v7x
topology: tpu7x:2x2x1
jax: 0.10.0
libtpu: 0.0.40
codegen_flags: <defaults>
</compile_context>

<pallas_src>
import functools

import numpy as np
import jax
import jax.numpy as jnp
from jax import lax
from jax.experimental import pallas as pl
from jax.experimental.pallas import tpu as pltpu


# --------------------------------------------------------------------------
# Small trace-time helpers (all static Python ints / numpy).
# --------------------------------------------------------------------------

def _tap_bounds(kk, pad, stride, L, Lo):
    """Output range [lo, hi) for which tap offset kk hits a real input element."""
    lo = max(0, -((kk - pad) // stride))                  # ceil((pad - kk)/stride)
    hi = min(Lo, (L - 1 + pad - kk) // stride + 1)
    return lo, hi


def _place(tap, lo, hi, total, axis, ident):
    """Embed `tap` (covering output range [lo, hi)) into a full-length axis,
    filling the uncovered border with the combine identity."""
    if lo == 0 and hi == total:
        return tap
    parts = []
    if lo > 0:
        shp = list(tap.shape)
        shp[axis] = lo
        parts.append(jnp.full(shp, ident, dtype=tap.dtype))
    parts.append(tap)
    if hi < total:
        shp = list(tap.shape)
        shp[axis] = total - hi
        parts.append(jnp.full(shp, ident, dtype=tap.dtype))
    return jnp.concatenate(parts, axis=axis)


def _inv_count(H, W, k, s, p, Ho, Wo):
    """1 / (number of valid, non-pad taps) per output position, shape (1, Ho, Wo)."""
    def counts(L, Lo):
        c = np.zeros((Lo,), np.float64)
        for o in range(Lo):
            for kk in range(k):
                if 0 <= o * s + kk - p < L:
                    c[o] += 1.0
        return c

    cnt = np.outer(counts(H, Ho), counts(W, Wo))
    if not np.all(cnt > 0):
        # Only possible when padding >= kernel_size, which PyTorch rejects.
        raise ValueError("pooling window with no valid elements "
                         "(padding too large for kernel_size)")
    return (1.0 / cnt).astype(np.float32).reshape(1, Ho, Wo)


def _round_up(v, m):
    return ((v + m - 1) // m) * m


def _padded_bytes(rows, cols, itemsize):
    """VMEM bytes of a (rows, cols) tile after (8, 128) sublane/lane padding."""
    return _round_up(max(rows, 1), 8) * _round_up(max(cols, 1), 128) * itemsize


def _vmem_budget_bytes():
    """Per-grid-step footprint budget derived from this chip's VMEM capacity."""
    cap = 64 * 1024 * 1024
    try:
        cap = int(pltpu.get_tpu_info().vmem_capacity_bytes)
    except Exception:
        pass
    # ~1/6 of physical VMEM, clamped to [2 MiB, 20 MiB]; with the explicit
    # vmem_limit_bytes below this is safe on v5e/v6e (128 MiB) and v7x (64 MiB).
    return int(min(20 * 2 ** 20, max(2 * 2 ** 20, cap // 6)))


def _choose_plane_block(NC, per_plane_bytes, budget_bytes):
    """Largest divisor of NC fitting the VMEM budget while keeping >= 4 grid
    steps when possible (>= 2 per TensorCore on v7x, plus pipeline overlap)."""
    target_steps = min(4, NC)
    cap = max(1, min(NC // target_steps, budget_bytes // max(per_plane_bytes, 1)))
    best = 1
    d = 1
    while d * d <= NC:
        if NC % d == 0:
            for t in (d, NC // d):
                if t <= cap and t > best:
                    best = t
        d += 1
    return best


# --------------------------------------------------------------------------
# Kernel
# --------------------------------------------------------------------------

def _pool_kernel(*refs, pool_type, k, s, p, H, W, Ho, Wo, cdtype):
    """Pools one (TB, H, W) block of planes in native NCHW layout.

    refs: x_ref (TB, H, W), [inv_ref (1, Ho, Wo) for avg], o_ref (TB, Ho, Wo).
    Out-of-range (padding) taps are simply skipped, so no pad values and no
    padded scratch are ever materialized.
    """
    if pool_type == "avg":
        x_ref, inv_ref, o_ref = refs
    else:
        x_ref, o_ref = refs
        inv_ref = None

    TB = x_ref.shape[0]
    ident = -jnp.inf if pool_type == "max" else 0.0

    def combine(a, b):
        return jnp.maximum(a, b) if pool_type == "max" else a + b

    # ---- Pass 1: reduce the k taps along W; each tap is sliced straight from
    #      the input ref (static offsets; strided read only when stride > 1).
    acc_w = None                                          # (TB, H, Wo)
    for kw in range(k):
        lo, hi = _tap_bounds(kw, p, s, W, Wo)
        if hi <= lo:
            continue
        n = hi - lo
        start = lo * s + kw - p
        if s == 1:
            tap = x_ref[:, :, pl.ds(start, n)]
        else:
            tap = x_ref[:, :, pl.ds(start, n, stride=s)]
        tap = _place(tap.astype(cdtype), lo, hi, Wo, axis=2, ident=ident)
        acc_w = tap if acc_w is None else combine(acc_w, tap)

    # ---- Pass 2: reduce the k taps along H on the column-reduced slab.
    acc = None                                            # (TB, Ho, Wo)
    for kh in range(k):
        lo, hi = _tap_bounds(kh, p, s, H, Ho)
        if hi <= lo:
            continue
        n = hi - lo
        start = lo * s + kh - p
        tap = lax.slice(acc_w, (0, start, 0),
                        (TB, start + (n - 1) * s + 1, Wo), (1, s, 1))
        tap = _place(tap, lo, hi, Ho, axis=1, ident=ident)
        acc = tap if acc is None else combine(acc, tap)

    if pool_type == "avg":
        # count_include_pad=False divisor; (1, Ho, Wo) broadcast over planes
        # is a plain leading-dim broadcast (no lane broadcast needed).
        acc = acc * inv_ref[...]

    o_ref[...] = acc.astype(o_ref.dtype)


# --------------------------------------------------------------------------
# Wrapper
# --------------------------------------------------------------------------

def pool_without_bn(x, *, pool_type, kernel_size, stride, padding):
    """Pallas implementation of PoolWithoutBN.forward for NCHW float inputs."""
    pool_type = pool_type.lower()
    if pool_type not in ("max", "avg"):
        raise NotImplementedError(
            "Pool doesn't support pooling type other than max and avg.")

    N, C, H, W = x.shape
    k, s, p = kernel_size, stride, padding
    if p > k // 2:
        raise ValueError("padding must be at most half the kernel size")
    Ho = (H + 2 * p - k) // s + 1
    Wo = (W + 2 * p - k) // s + 1
    NC = N * C

    xr = x.reshape(NC, H, W)                 # free view, native NCHW layout
    itemsize = jnp.dtype(x.dtype).itemsize
    cdtype = x.dtype if pool_type == "max" else jnp.float32
    citem = jnp.dtype(cdtype).itemsize

    # Honest per-plane VMEM accounting: (8,128)-padded blocks, double buffers,
    # plus the two in-kernel accumulators and one live tap each.
    per_plane = (
        2 * _padded_bytes(H, W, itemsize)        # input block (double-buffered)
        + 2 * _padded_bytes(Ho, Wo, itemsize)    # output block (double-buffered)
        + 2 * _padded_bytes(H, Wo, citem)        # pass-1 accumulator + live tap
        + 2 * _padded_bytes(Ho, Wo, citem)       # pass-2 accumulator + live tap
    )
    budget = _vmem_budget_bytes()
    TB = _choose_plane_block(NC, per_plane, budget)

    fixed = 2 * _padded_bytes(Ho, Wo, 4)         # avg reciprocal block
    footprint = TB * per_plane + fixed
    vmem_limit = int(min(40 * 2 ** 20,
                         max(16 * 2 ** 20, int(footprint * 1.5) + 2 * 2 ** 20)))

    kernel = functools.partial(
        _pool_kernel, pool_type=pool_type, k=k, s=s, p=p,
        H=H, W=W, Ho=Ho, Wo=Wo, cdtype=cdtype)

    in_specs = [pl.BlockSpec((TB, H, W), lambda i: (i, 0, 0))]
    inputs = [xr]
    if pool_type == "avg":
        in_specs.append(pl.BlockSpec((1, Ho, Wo), lambda i: (0, 0, 0)))
        inputs.append(jnp.asarray(_inv_count(H, W, k, s, p, Ho, Wo)))

    out = pl.pallas_call(
        kernel,
        out_shape=jax.ShapeDtypeStruct((NC, Ho, Wo), x.dtype),
        grid_spec=pltpu.PrefetchScalarGridSpec(
            num_scalar_prefetch=0,
            grid=(NC // TB,),
            in_specs=in_specs,
            out_specs=pl.BlockSpec((TB, Ho, Wo), lambda i: (i, 0, 0))),
        compiler_params=pltpu.CompilerParams(
            dimension_semantics=("parallel",),
            vmem_limit_bytes=vmem_limit),
    )(*inputs)

    return out.reshape(N, C, Ho, Wo)


# --------------------------------------------------------------------------
# Pure-JAX reference (matches PyTorch semantics) and self-test
# --------------------------------------------------------------------------

def _reference_pool(x, *, pool_type, kernel_size, stride, padding):
    k, s, p = kernel_size, stride, padding
    dims, strides = (1, 1, k, k), (1, 1, s, s)
    pads = [(0, 0), (0, 0), (p, p), (p, p)]
    if pool_type == "max":
        init = jnp.array(-jnp.inf, dtype=x.dtype)
        return lax.reduce_window(x, init, lax.max, dims, strides, pads)
    xf = x.astype(jnp.float32)
    zero = jnp.array(0.0, dtype=jnp.float32)
    summed = lax.reduce_window(xf, zero, lax.add, dims, strides, pads)
    counts = lax.reduce_window(jnp.ones_like(xf), zero, lax.add,
                               dims, strides, pads)
    return (summed / counts).astype(x.dtype)


if __name__ == "__main__":
    key = jax.random.PRNGKey(0)
    x32 = jax.random.normal(key, (2, 4, 16, 16), dtype=jnp.float32)
    x16 = x32.astype(jnp.bfloat16)

    # (input, pool_type, kernel_size, stride, padding) -- covers the CDARTS
    # normal-cell (3,1,1) and reduce-cell (3,2,1) configs, f32 and bf16.
    cases = [
        (x32, "max", 3, 1, 1),
        (x32, "avg", 3, 1, 1),
        (x32, "avg", 3, 2, 1),
        (x16, "max", 3, 2, 1),
    ]

    ok = True
    for x, pool_type, k, s, p in cases:
        out = jax.block_until_ready(pool_without_bn(
            x, pool_type=pool_type, kernel_size=k, stride=s, padding=p))
        ref = _reference_pool(x, pool_type=pool_type, kernel_size=k,
                              stride=s, padding=p)
        ok = ok and bool(jnp.allclose(out.astype(jnp.float32),
                                      ref.astype(jnp.float32),
                                      atol=1e-5, rtol=1e-5))

    if not ok:
        raise AssertionError("Pallas pooling kernel mismatch vs reference")
    print("KERNEL_OK")
</pallas_src>

<mosaic_0001>
module attributes {stable_mosaic.version = 11 : i64} {
  func.func @_pool_kernel(%arg0: i32, %arg1: memref<2x16x16xf32, #tpu.memory_space<vmem>>, %arg2: memref<2x16x16xf32, #tpu.memory_space<vmem>>) attributes {dimension_semantics = [#tpu.dimension_semantics<parallel>], iteration_bounds = array<i64: 4>, scalar_prefetch = 0 : i64, scratch_operands = 0 : i64, tpu.core_type = #tpu.core_type<tc>, window_params = [{transform_indices = @transform_0, window_bounds = array<i64: 2, 16, 16>}, {transform_indices = @transform_1, window_bounds = array<i64: 2, 16, 16>}]} {
    %c0 = arith.constant 0 : index
    %c0_0 = arith.constant 0 : index
    %c0_1 = arith.constant 0 : index
    %0 = vector.load %arg1[%c0, %c0_0, %c0_1] : memref<2x16x16xf32, #tpu.memory_space<vmem>>, vector<2x16x15xf32>
    %cst = arith.constant 0xFF800000 : f32
    %1 = vector.broadcast %cst : f32 to vector<2x16x1xf32>
    %2 = tpu.concatenate %1, %0 in 2 : vector<2x16x1xf32>, vector<2x16x15xf32> -> vector<2x16x16xf32>
    %c0_2 = arith.constant 0 : index
    %c0_3 = arith.constant 0 : index
    %c0_4 = arith.constant 0 : index
    %3 = vector.load %arg1[%c0_2, %c0_3, %c0_4] : memref<2x16x16xf32, #tpu.memory_space<vmem>>, vector<2x16x16xf32>
    %4 = arith.maximumf %2, %3 : vector<2x16x16xf32>
    %c0_5 = arith.constant 0 : index
    %c0_6 = arith.constant 0 : index
    %c1 = arith.constant 1 : index
    %5 = vector.load %arg1[%c0_5, %c0_6, %c1] : memref<2x16x16xf32, #tpu.memory_space<vmem>>, vector<2x16x15xf32>
    %cst_7 = arith.constant 0xFF800000 : f32
    %6 = vector.broadcast %cst_7 : f32 to vector<2x16x1xf32>
    %7 = tpu.concatenate %5, %6 in 2 : vector<2x16x15xf32>, vector<2x16x1xf32> -> vector<2x16x16xf32>
    %8 = arith.maximumf %4, %7 : vector<2x16x16xf32>
    %9 = vector.extract_strided_slice %8 {offsets = [0, 0, 0], sizes = [2, 15, 16], strides = [1, 1, 1]} : vector<2x16x16xf32> to vector<2x15x16xf32>
    %cst_8 = arith.constant 0xFF800000 : f32
    %10 = vector.broadcast %cst_8 : f32 to vector<2x1x16xf32>
    %11 = tpu.concatenate %10, %9 in 1 : vector<2x1x16xf32>, vector<2x15x16xf32> -> vector<2x16x16xf32>
    %12 = vector.extract_strided_slice %8 {offsets = [0, 0, 0], sizes = [2, 16, 16], strides = [1, 1, 1]} : vector<2x16x16xf32> to vector<2x16x16xf32>
    %13 = arith.maximumf %11, %12 : vector<2x16x16xf32>
    %14 = vector.extract_strided_slice %8 {offsets = [0, 1, 0], sizes = [2, 15, 16], strides = [1, 1, 1]} : vector<2x16x16xf32> to vector<2x15x16xf32>
    %cst_9 = arith.constant 0xFF800000 : f32
    %15 = vector.broadcast %cst_9 : f32 to vector<2x1x16xf32>
    %16 = tpu.concatenate %14, %15 in 1 : vector<2x15x16xf32>, vector<2x1x16xf32> -> vector<2x16x16xf32>
    %17 = arith.maximumf %13, %16 : vector<2x16x16xf32>
    %c0_10 = arith.constant 0 : index
    %c0_11 = arith.constant 0 : index
    %c0_12 = arith.constant 0 : index
    %18 = vector.load %arg2[%c0_10, %c0_11, %c0_12] : memref<2x16x16xf32, #tpu.memory_space<vmem>>, vector<2x16x16xf32>
    tpu.vector_store %arg2[%c0_10, %c0_11, %c0_12], %17 {strides = array<i32>} : memref<2x16x16xf32, #tpu.memory_space<vmem>>, vector<2x16x16xf32>,
    return
  }
  func.func @transform_0(%arg0: i32) -> (i32, i32, i32) {
    %c0_i32 = arith.constant 0 : i32
    %c0_i32_0 = arith.constant 0 : i32
    %c0_i32_1 = arith.constant 0 : i32
    return %arg0, %c0_i32, %c0_i32_0 : i32, i32, i32
  }
  func.func @transform_1(%arg0: i32) -> (i32, i32, i32) {
    %c0_i32 = arith.constant 0 : i32
    %c0_i32_0 = arith.constant 0 : i32
    %c0_i32_1 = arith.constant 0 : i32
    return %arg0, %c0_i32, %c0_i32_0 : i32, i32, i32
  }
}

</mosaic_0001>

<llo_original>
// kernel: tpu_custom_call.1
$region0: #{tpu_custom_call.1}
  #allocation0 [shape = 'u32[]', space=smem, size = 0x4, offset = 0x4, fixed_abs, tag = 'smem constant byte address 0x4 - core index']
  #allocation1 [shape = 'u32[144,128]{1,0:T(1,128)}', space=vmem, size = 0x12000, scoped, tag = 'internal scratch']
  %s0 = inlined_call_operand.hbm [shape: f32[8,16,16], index: 0, kind: input, shape index: {}]
  %s1 = inlined_call_operand.hbm [shape: f32[8,16,16], index: 1, kind: output, shape index: {}]
  %s2 = sld [smem:[#allocation0]]
  $region41: #{tpu_custom_call.1} parent=0
    _
  %s4 = ssub.s32 1, %s2
  %s5 = scalar_select 0, %s4, %s2
  $region1: #{tpu_custom_call.1} parent=0
    #allocation2 [shape = 'u8[32768]{0}', space=vmem, size = 0x8000, scoped, tag = 'input window, operand 0']
    #allocation3 [shape = 's32[2]{0}', space=sflag, size = 0x8, scoped, tag = 'scoped memory for tpu_custom_call.1']
    #allocation4 [shape = 's32[2]{0}', space=sflag, size = 0x8, scoped, tag = 'scoped memory for tpu_custom_call.1']
    #allocation5 [shape = 'u8[32768]{0}', space=vmem, size = 0x8000, scoped, tag = 'output window, operand 0']
    %6 = vsyncpa [#allocation3], 0
    %s7 = scalar_lea.sflag [#allocation3], 1
    %8 = vsyncpa %s7, 0
    %9 = vsyncpa [#allocation4], 0
    %s10 = scalar_lea.sflag [#allocation4], 1
    %11 = vsyncpa %s10, 0
    loop: start=0, step=1, limit=6
    $region2: #{tpu_custom_call.1} parent=1 // loop_pre_header
      _
    $region3: #{tpu_custom_call.1} parent=1 // loop_header
      %s13 = sphi 0, %s17
      %p14 = scmp.ge.s32.totalorder %s13, 6
      %s23 = sphi 0, %s25
      %s26 = sphi 0, %s23
      %s27 = sphi 0, %s26
      %s43 = sphi 0, %s27
      %s49 = sphi 0, %s51
      %s52 = sphi 0, %s49
      %s53 = sphi 0, %s52
      %s69 = sphi 0, %s53
    $region4: #{tpu_custom_call.1} parent=1 // loop_header_branch
      %16 = sbr.rel (%p14) target = $region8
    $region5: #{tpu_custom_call.1} parent=1 // loop_body
      %s18 = ssub.s32 %s13, 1
      %s19 = ssub.s32 %s13, 2
      %s20 = sadd.s32 %s13, 1
      %s21 = ssub.s32 %s13, %s20
      %p22 = scmp.eq.s32.totalorder %s21, 0
      %s24 = sadd.s32 %s23, 1
      %s25 = scalar_select %p22, %s23, %s24
      %p28 = pneg %p22
      %p29 = scmp.eq.s32.totalorder %s13, 3
      %p30 = por %p28, %p29
      %p31 = scmp.ne.s32.totalorder %s23, %s26
      %p32 = scmp.eq.s32.totalorder %s13, 0
      %p33 = por %p31, %p32
      %p34 = scmp.ne.s32.totalorder %s23, %s26
      %p35 = scmp.eq.s32.totalorder %s18, 3
      %p36 = por %p34, %p35
      %p37 = scmp.ne.s32.totalorder %s26, %s27
      %p38 = scmp.eq.s32.totalorder %s18, 0
      %p39 = por %p37, %p38
      %p40 = scmp.ne.s32.totalorder %s26, %s27
      %p41 = scmp.eq.s32.totalorder %s19, 3
      %p42 = por %p40, %p41
      %p44 = scmp.ne.s32.totalorder %s27, %s43
      %p45 = scmp.eq.s32.totalorder %s19, 0
      %p46 = por %p44, %p45
      %s47 = ssub.s32 %s13, %s20
      %p48 = scmp.eq.s32.totalorder %s47, 0
      %s50 = sadd.s32 %s49, 1
      %s51 = scalar_select %p48, %s49, %s50
      %p54 = pneg %p48
      %p55 = scmp.eq.s32.totalorder %s13, 3
      %p56 = por %p54, %p55
      %p57 = scmp.ne.s32.totalorder %s49, %s52
      %p58 = scmp.eq.s32.totalorder %s13, 0
      %p59 = por %p57, %p58
      %p60 = scmp.ne.s32.totalorder %s49, %s52
      %p61 = scmp.eq.s32.totalorder %s18, 3
      %p62 = por %p60, %p61
      %p63 = scmp.ne.s32.totalorder %s52, %s53
      %p64 = scmp.eq.s32.totalorder %s18, 0
      %p65 = por %p63, %p64
      %p66 = scmp.ne.s32.totalorder %s52, %s53
      %p67 = scmp.eq.s32.totalorder %s19, 3
      %p68 = por %p66, %p67
      %p70 = scmp.ne.s32.totalorder %s53, %s69
      %p71 = scmp.eq.s32.totalorder %s19, 0
      %p72 = por %p70, %p71
      %p73 = scmp.le.s32.totalorder 1, %s13
      %p74 = scmp.lt.s32.totalorder %s13, 5
      %p75 = pnand %p73, %p74
      %p76 = pneg %p75
      // Predicated region
      $region9: #{tpu_custom_call.1} parent=5 // pred_check
        _
      $region10: #{tpu_custom_call.1} parent=5 // pred_check_branch
        %78 = sbr.rel (%p75) target = $region12
      $region11: #{tpu_custom_call.1} parent=5 // pred_region
        %s79 = ssub.s32 %s13, 1
      $region12: #{tpu_custom_call.1} parent=5 // pred_fallthru
        _
      %p80 = scmp.lt.s32.totalorder %s13, 4
      // Predicated region
      $region13: #{tpu_custom_call.1} parent=5 // pred_check
        %p81 = pneg %p80
      $region14: #{tpu_custom_call.1} parent=5 // pred_check_branch
        %83 = sbr.rel (%p81) target = $region16
      $region15: #{tpu_custom_call.1} parent=5 // pred_region
        // Predicated region
        $region17: #{tpu_custom_call.1} parent=15 // pred_check
          %p84 = pneg %p33
        $region18: #{tpu_custom_call.1} parent=15 // pred_check_branch
          %86 = sbr.rel (%p84) target = $region20
        $region19: #{tpu_custom_call.1} parent=15 // pred_region
          %s87 = sand.u32 %s23, 1
          %s88 = scalar_lea.sflag [#allocation3], %s87
          %s89 = sand.u32 %s23, 1
          %s90 = smul.addr %s89, 32
          %s91 = scalar_lea.vmem [#allocation2], %s90
          %s92 = smul.u32 2, %s13
          %s94 = ssub.s32 512, 512
          %95 = vsyncadd %s88, %s94
          %s96 = smul.addr %s92, 2
          %s97 = smul.addr %s96, 128
          %s98 = scalar_lea.hbm %s0, %s97
          %s99 = sshll.u32 %s91, 4
          %s100 = int_to_ptr.vmem [resolvable:$true] %s99
          %105 = dma.hbm_to_vmem [thread:$0]  %s98, 512, %s100, %s88, 128, 128, 8
        $region20: #{tpu_custom_call.1} parent=15 // pred_fallthru
          _
      $region16: #{tpu_custom_call.1} parent=5 // pred_fallthru
        _
      %p106 = scmp.le.s32.totalorder 1, %s13
      %p107 = scmp.lt.s32.totalorder %s13, 5
      %p108 = pnand %p106, %p107
      %p109 = pneg %p108
      // Predicated region
      $region21: #{tpu_custom_call.1} parent=5 // pred_check
        _
      $region22: #{tpu_custom_call.1} parent=5 // pred_check_branch
        %111 = sbr.rel (%p108) target = $region24
      $region23: #{tpu_custom_call.1} parent=5 // pred_region
        %s112 = ssub.s32 %s13, 1
        %s113 = sand.u32 %s26, 1
        %s114 = scalar_lea.sflag [#allocation3], %s113
        %s115 = sand.u32 %s26, 1
        %s116 = smul.addr %s115, 32
        %s117 = scalar_lea.vmem [#allocation2], %s116
        // Predicated region
        $region25: #{tpu_custom_call.1} parent=23 // pred_check
          %p118 = pneg %p39
        $region26: #{tpu_custom_call.1} parent=23 // pred_check_branch
          %120 = sbr.rel (%p118) target = $region28
        $region27: #{tpu_custom_call.1} parent=23 // pred_region
          %121 = dma.done %s114, 512
        $region28: #{tpu_custom_call.1} parent=23 // pred_fallthru
          _
        %s122 = sand.u32 %s26, 1
        %s123 = scalar_lea.sflag [#allocation3], %s122
        %s124 = sand.u32 %s26, 1
        %s125 = smul.addr %s124, 32
        %s126 = scalar_lea.vmem [#allocation2], %s125
        %p127 = pneg %p39
        %p128 = pneg %p36
        %p129 = pneg %p65
        %p130 = pneg %p62
        %s131 = sand.u32 %s52, 1
        %s132 = scalar_lea.sflag [#allocation4], %s131
        %s133 = sand.u32 %s52, 1
        %s134 = smul.addr %s133, 32
        %s135 = scalar_lea.vmem [#allocation5], %s134
        %s136 = smul.u32 2, %s18
        %s137 = smul.u32 2, %s18
        %v138 = vld [vmem:[%s117] sm:$0xff]
        %v139 = vld [vmem:[%s117 + $0x8] sm:$0xff]
        %v140 = vld [vmem:[%s117 + $0x10] sm:$0xff]
        %v141 = vld [vmem:[%s117 + $0x18] sm:$0xff]
        %146 = vrot.lane.b32.xlu0 %v138, 1
        %v147 = vpop.permute.xlu0 %146
        %148 = vrot.lane.b32.xlu0 %v139, 1
        %v149 = vpop.permute.xlu0 %148
        %150 = vrot.lane.b32.xlu0 %v140, 1
        %v151 = vpop.permute.xlu0 %150
        %152 = vrot.lane.b32.xlu0 %v141, 1
        %v153 = vpop.permute.xlu0 %152
        %vm158 = vcmask 7168
        %v159 = vsel %vm158, -inf, %v147
        %v160 = vsel %vm158, -inf, %v149
        %v161 = vsel %vm158, -inf, %v151
        %v162 = vsel %vm158, -inf, %v153
        %v163 = vmax.f32 %v159, %v138
        %v164 = vmax.f32 %v160, %v139
        %v165 = vmax.f32 %v161, %v140
        %v166 = vmax.f32 %v162, %v141
        %167 = vrot.lane.b32.xlu0 %v138, 127
        %v168 = vpop.permute.xlu0 %167
        %169 = vrot.lane.b32.xlu0 %v139, 127
        %v170 = vpop.permute.xlu0 %169
        %171 = vrot.lane.b32.xlu0 %v140, 127
        %v172 = vpop.permute.xlu0 %171
        %173 = vrot.lane.b32.xlu0 %v141, 127
        %v174 = vpop.permute.xlu0 %173
        %vm179 = vcmask 121856
        %v180 = vsel %vm179, %v168, -inf
        %v181 = vsel %vm179, %v170, -inf
        %v182 = vsel %vm179, %v172, -inf
        %v183 = vsel %vm179, %v174, -inf
        %v184 = vmax.f32 %v163, %v180
        %v185 = vmax.f32 %v164, %v181
        %v186 = vmax.f32 %v165, %v182
        %v187 = vmax.f32 %v166, %v183
        %vm192 = vcmask 1040384
        %v193 = vrot.slane %v184, 7
        %v194 = vrot.slane %v185, 7
        %v195 = vsel %vm192, %v193, %v194
        %v196 = vrot.slane %v186, 7
        %v197 = vrot.slane %v187, 7
        %v198 = vsel %vm192, %v196, %v197
        %v203 = vsel %vm192, -inf, %v193
        %v204 = vsel %vm192, -inf, %v196
        %v205 = vmax.f32 %v203, %v184
        %v206 = vmax.f32 %v195, %v185
        %v207 = vmax.f32 %v204, %v186
        %v208 = vmax.f32 %v198, %v187
        %vm209 = vcmask 1046528
        %v210 = vrot.slane %v184, 1
        %v211 = vrot.slane %v185, 1
        %v212 = vsel %vm209, %v210, %v211
        %v213 = vrot.slane %v186, 1
        %v214 = vrot.slane %v187, 1
        %v215 = vsel %vm209, %v213, %v214
        %v220 = vsel %vm209, %v211, -inf
        %v221 = vsel %vm209, %v214, -inf
        %v222 = vmax.f32 %v205, %v212
        %v223 = vmax.f32 %v206, %v220
        %v224 = vmax.f32 %v207, %v215
        %v225 = vmax.f32 %v208, %v221
        %vm226 = vcmask 130048
        %227 = vst.msk [vmem:[%s135] sm:$0xff] %vm226, %v222
        %228 = vst.msk [vmem:[%s135 + $0x8] sm:$0xff] %vm226, %v223
        %229 = vst.msk [vmem:[%s135 + $0x10] sm:$0xff] %vm226, %v224
        %230 = vst.msk [vmem:[%s135 + $0x18] sm:$0xff] %vm226, %v225
        %s231 = sand.u32 %s52, 1
        %s232 = scalar_lea.sflag [#allocation4], %s231
        %s233 = sand.u32 %s52, 1
        %s234 = smul.addr %s233, 32
        %s235 = scalar_lea.vmem [#allocation5], %s234
        // Predicated region
        $region29: #{tpu_custom_call.1} parent=23 // pred_check
          %p236 = pneg %p62
        $region30: #{tpu_custom_call.1} parent=23 // pred_check_branch
          %238 = sbr.rel (%p236) target = $region32
        $region31: #{tpu_custom_call.1} parent=23 // pred_region
          %s239 = smul.u32 2, %s18
          %s241 = ssub.s32 512, 512
          %242 = vsyncadd %s232, %s241
          %s243 = smul.addr %s239, 2
          %s244 = smul.addr %s243, 128
          %s245 = scalar_lea.hbm %s1, %s244
          %s246 = sshll.u32 %s235, 4
          %s247 = int_to_ptr.vmem [resolvable:$true] %s246
          %252 = dma.vmem_to_hbm [thread:$0]  %s247, 512, %s245, %s232, 128, 128, 8
        $region32: #{tpu_custom_call.1} parent=23 // pred_fallthru
          _
      $region24: #{tpu_custom_call.1} parent=5 // pred_fallthru
        _
      %p253 = scmp.le.s32.totalorder 2, %s13
      // Predicated region
      $region33: #{tpu_custom_call.1} parent=5 // pred_check
        %p254 = pneg %p253
      $region34: #{tpu_custom_call.1} parent=5 // pred_check_branch
        %256 = sbr.rel (%p254) target = $region36
      $region35: #{tpu_custom_call.1} parent=5 // pred_region
        %s257 = ssub.s32 %s13, 2
        // Predicated region
        $region37: #{tpu_custom_call.1} parent=35 // pred_check
          %p258 = pneg %p68
        $region38: #{tpu_custom_call.1} parent=35 // pred_check_branch
          %260 = sbr.rel (%p258) target = $region40
        $region39: #{tpu_custom_call.1} parent=35 // pred_region
          %s261 = sand.u32 %s53, 1
          %s262 = scalar_lea.sflag [#allocation4], %s261
          %s263 = sand.u32 %s53, 1
          %s264 = smul.addr %s263, 32
          %s265 = scalar_lea.vmem [#allocation5], %s264
          %266 = dma.done %s262, 512
        $region40: #{tpu_custom_call.1} parent=35 // pred_fallthru
          _
      $region36: #{tpu_custom_call.1} parent=5 // pred_fallthru
        _
    $region6: #{tpu_custom_call.1} parent=1 // loop_footer
      %s17 = sadd.s32 1, %s13
    $region7: #{tpu_custom_call.1} parent=1 // loop_footer_branch
      %12 = sbr.rel target = $region3
    $region8: #{tpu_custom_call.1} parent=1 // loop_exit
      _
    %267 = vsyncpa [#allocation3], 1
    %s268 = scalar_lea.sflag [#allocation3], 1
    %269 = vsyncpa %s268, 1
    %270 = vsyncpa [#allocation4], 1
    %s271 = scalar_lea.sflag [#allocation4], 1
    %272 = vsyncpa %s271, 1

</llo_original>
